<compile_context>
chip_gen: v7x
topology: tpu7x:2x2x1
jax: 0.10.0
libtpu: 0.0.40
codegen_flags: <defaults>
</compile_context>

<pallas_src>
import jax
import jax.numpy as jnp
from jax.experimental import pallas as pl
from jax.experimental.pallas import tpu as pltpu


def _round_up(x: int, m: int) -> int:
    return (x + m - 1) // m * m


def _net_kernel(x_ref, w_ref, b_ref, o_ref):
    # x_ref : (TB, D) float32  VMEM (one batch tile)
    # w_ref : (1, D)  float32  VMEM (resident across the whole grid)
    # b_ref : (1,)    float32  SMEM (scalar bias)
    # o_ref : (TB, 1) float32  VMEM
    x = x_ref[...]
    w = w_ref[...]                     # (1, D) broadcasts over the row axis
    b = b_ref[0]                       # scalar read from SMEM
    # fc with out_features == 1: VPU multiply + XLU lane reduce (no MXU needed)
    logits = jnp.sum(x * w, axis=-1, keepdims=True) + b   # (TB, 1) f32
    o_ref[...] = jax.nn.sigmoid(logits)


def net_forward(x, weight, bias, *, block_rows: int = 2048):
    """Forward pass of Net: sigmoid(x @ weight.T + bias).

    x:      (..., D) float32   (arbitrary leading dims, like nn.Linear)
    weight: (1, D)   float32   (PyTorch nn.Linear weight layout)
    bias:   (1,)     float32
    returns (..., 1) float32
    """
    orig_shape = x.shape
    D = orig_shape[-1]
    x2 = x.reshape(-1, D)
    B = x2.shape[0]

    # Cap the batch tile so 2 (double-buffered) x tiles stay inside ~16 MiB;
    # keep rows a multiple of 8 (sublane granularity).
    bytes_per_row = 4 * D
    vmem_budget = 16 * 1024 * 1024
    max_rows = max(8, (vmem_budget // (2 * bytes_per_row)) // 8 * 8)
    tb = min(block_rows, max_rows, _round_up(B, 8))
    tb = max(8, (tb // 8) * 8)

    # Pad batch to a multiple of the tile (padded rows are sliced off afterwards).
    b_padded = _round_up(B, tb)
    if b_padded != B:
        x2 = jnp.pad(x2, ((0, b_padded - B), (0, 0)))

    grid = (b_padded // tb,)

    out = pl.pallas_call(
        _net_kernel,
        out_shape=jax.ShapeDtypeStruct((b_padded, 1), jnp.float32),
        grid_spec=pltpu.PrefetchScalarGridSpec(
            num_scalar_prefetch=0,
            grid=grid,
            in_specs=[
                # x: one (tb, D) tile per grid step (auto double-buffered DMA)
                pl.BlockSpec((tb, D), lambda i: (i, 0)),
                # weight: constant block index -> fetched once, stays resident
                pl.BlockSpec((1, D), lambda i: (0, 0)),
                # bias: whole (1,) array in SMEM
                pl.BlockSpec(memory_space=pltpu.MemorySpace.SMEM),
            ],
            out_specs=pl.BlockSpec((tb, 1), lambda i: (i, 0)),
        ),
        compiler_params=pltpu.CompilerParams(
            # batch tiles are independent -> lets v7x shard across its 2 TCs
            dimension_semantics=("parallel",),
            vmem_limit_bytes=32 * 1024 * 1024,
        ),
    )(x2, weight, bias)

    out = out[:B]
    return out.reshape(orig_shape[:-1] + (1,))


if __name__ == "__main__":
    key = jax.random.PRNGKey(0)
    kx, kw, kb, kx2 = jax.random.split(key, 4)

    # Small, deterministic example: batch=8, input_size=32
    B, D = 8, 32
    x = jax.random.normal(kx, (B, D), dtype=jnp.float32)
    bound = 1.0 / (D ** 0.5)
    weight = jax.random.uniform(kw, (1, D), jnp.float32, -bound, bound)
    bias = jax.random.uniform(kb, (1,), jnp.float32, -bound, bound)

    out = jax.block_until_ready(net_forward(x, weight, bias))
    ref = jax.nn.sigmoid(x @ weight.T + bias.reshape(1, 1))
    assert out.shape == (B, 1)
    assert jnp.allclose(out, ref, atol=1e-5, rtol=1e-5)

    # Secondary check: non-multiple-of-8 batch exercises the padding path.
    B2 = 13
    x2 = jax.random.normal(kx2, (B2, D), dtype=jnp.float32)
    out2 = jax.block_until_ready(net_forward(x2, weight, bias))
    ref2 = jax.nn.sigmoid(x2 @ weight.T + bias.reshape(1, 1))
    assert out2.shape == (B2, 1)
    assert jnp.allclose(out2, ref2, atol=1e-5, rtol=1e-5)

    print("KERNEL_OK")
</pallas_src>

<mosaic_0001>
module attributes {stable_mosaic.version = 11 : i64} {
  func.func @_net_kernel(%arg0: i32, %arg1: memref<8x32xf32, #tpu.memory_space<vmem>>, %arg2: memref<1x32xf32, #tpu.memory_space<vmem>>, %arg3: memref<1xf32, #tpu.memory_space<smem>>, %arg4: memref<8x1xf32, #tpu.memory_space<vmem>>) attributes {dimension_semantics = [#tpu.dimension_semantics<parallel>], iteration_bounds = array<i64: 1>, scalar_prefetch = 0 : i64, scratch_operands = 0 : i64, tpu.core_type = #tpu.core_type<tc>, window_params = [{transform_indices = @transform_0, window_bounds = array<i64: 8, 32>}, {pipeline_mode = #tpu.pipeline_mode<synchronous>, transform_indices = @transform_1, window_bounds = array<i64: 1, 32>}, {transform_indices = @transform_2, window_bounds = array<i64: 1>}, {transform_indices = @transform_3, window_bounds = array<i64: 8, 1>}]} {
    %c0 = arith.constant 0 : index
    %c0_0 = arith.constant 0 : index
    %0 = vector.load %arg1[%c0, %c0_0] : memref<8x32xf32, #tpu.memory_space<vmem>>, vector<8x32xf32>
    %c0_1 = arith.constant 0 : index
    %c0_2 = arith.constant 0 : index
    %1 = vector.load %arg2[%c0_1, %c0_2] : memref<1x32xf32, #tpu.memory_space<vmem>>, vector<1x32xf32>
    %c0_3 = arith.constant 0 : index
    %2 = memref.load %arg3[%c0_3] : memref<1xf32, #tpu.memory_space<smem>>
    %3 = vector.broadcast %1 : vector<1x32xf32> to vector<8x32xf32>
    %4 = arith.mulf %0, %3 : vector<8x32xf32>
    %cst = arith.constant dense<0.000000e+00> : vector<8xf32>
    %5 = vector.multi_reduction <add>, %4, %cst [1] : vector<8x32xf32> to vector<8xf32>
    %6 = vector.shape_cast %5 : vector<8xf32> to vector<8x1xf32>
    %7 = vector.broadcast %2 : f32 to vector<8x1xf32>
    %8 = arith.addf %6, %7 : vector<8x1xf32>
    %9 = arith.negf %8 : vector<8x1xf32>
    %10 = math.exp %9 : vector<8x1xf32>
    %cst_4 = arith.constant 1.000000e+00 : f32
    %11 = vector.broadcast %cst_4 : f32 to vector<8x1xf32>
    %12 = arith.addf %11, %10 : vector<8x1xf32>
    %13 = arith.divf %11, %12 : vector<8x1xf32>
    %c0_5 = arith.constant 0 : index
    %c0_6 = arith.constant 0 : index
    %14 = vector.load %arg4[%c0_5, %c0_6] : memref<8x1xf32, #tpu.memory_space<vmem>>, vector<8x1xf32>
    tpu.vector_store %arg4[%c0_5, %c0_6], %13 {strides = array<i32>} : memref<8x1xf32, #tpu.memory_space<vmem>>, vector<8x1xf32>,
    return
  }
  func.func @transform_0(%arg0: i32) -> (i32, i32) {
    %c0_i32 = arith.constant 0 : i32
    %c0_i32_0 = arith.constant 0 : i32
    return %arg0, %c0_i32 : i32, i32
  }
  func.func @transform_1(%arg0: i32) -> (i32, i32) {
    %c0_i32 = arith.constant 0 : i32
    %c0_i32_0 = arith.constant 0 : i32
    %c0_i32_1 = arith.constant 0 : i32
    return %c0_i32, %c0_i32_0 : i32, i32
  }
  func.func @transform_2(%arg0: i32) -> i32 {
    %c0_i32 = arith.constant 0 : i32
    %c0_i32_0 = arith.constant 0 : i32
    return %c0_i32 : i32
  }
  func.func @transform_3(%arg0: i32) -> (i32, i32) {
    %c0_i32 = arith.constant 0 : i32
    %c0_i32_0 = arith.constant 0 : i32
    return %arg0, %c0_i32 : i32, i32
  }
}

</mosaic_0001>

<llo_original>
// kernel: tpu_custom_call.1
$region0: #{tpu_custom_call.1}
  #allocation0 [shape = 'u32[]', space=smem, size = 0x4, offset = 0x4, fixed_abs, tag = 'smem constant byte address 0x4 - core index']
  #allocation1 [shape = 'u32[144,128]{1,0:T(1,128)}', space=vmem, size = 0x12000, scoped, tag = 'internal scratch']
  #allocation2 [shape = 'f32[1]{0:T(128)S(6)}', space=smem, size = 0x200, scoped, tag = 'scoped memory for tpu_custom_call.1']
  %s0 = inlined_call_operand.hbm [shape: f32[8,32], index: 0, kind: input, shape index: {}]
  %s1 = inlined_call_operand.vmem [shape: f32[1,32], index: 1, kind: input, shape index: {}]
  %s2 = inlined_call_operand.<no memory space> [shape: f32[1], index: 2, kind: input, shape index: {}]
  %s3 = inlined_call_operand.vmem [shape: f32[8,1], index: 3, kind: output, shape index: {}]
  %s4 = sld [smem:[#allocation0]]
  $region26: #{tpu_custom_call.1} parent=0
    _
  %s6 = ssub.s32 1, %s4
  %s7 = scalar_select 0, %s6, %s4
  %8 = sst [smem:[#allocation2]] %s2
  $region1: #{tpu_custom_call.1} parent=0
    #allocation3 [shape = 'u8[4096]{0}', space=vmem, size = 0x1000, scoped, tag = 'input window, operand 0, single buffered']
    #allocation4 [shape = 's32[1]{0}', space=sflag, size = 0x4, scoped, tag = 'scoped memory for tpu_custom_call.1']
    %9 = vsyncpa [#allocation4], 0
    // Predicated region
    $region2: #{tpu_custom_call.1} parent=1 // pred_check
      _
    $region3: #{tpu_custom_call.1} parent=1 // pred_check_branch
      %11 = sbr.rel (0) target = $region5
    $region4: #{tpu_custom_call.1} parent=1 // pred_region
      %s13 = ssub.s32 128, 128
      %14 = vsyncadd [#allocation4], %s13
      %s16 = sshll.u32 [#allocation3], 4
      %s17 = int_to_ptr.vmem [resolvable:$true] %s16
      %19 = dma.hbm_to_vmem [thread:$0]  %s0, 128, %s17, [#allocation4]
    $region5: #{tpu_custom_call.1} parent=1 // pred_fallthru
      _
    // Predicated region
    $region6: #{tpu_custom_call.1} parent=1 // pred_check
      _
    $region7: #{tpu_custom_call.1} parent=1 // pred_check_branch
      %21 = sbr.rel (0) target = $region9
    $region8: #{tpu_custom_call.1} parent=1 // pred_region
      _
    $region9: #{tpu_custom_call.1} parent=1 // pred_fallthru
      _
    // Predicated region
    $region10: #{tpu_custom_call.1} parent=1 // pred_check
      _
    $region11: #{tpu_custom_call.1} parent=1 // pred_check_branch
      %23 = sbr.rel (0) target = $region13
    $region12: #{tpu_custom_call.1} parent=1 // pred_region
      _
    $region13: #{tpu_custom_call.1} parent=1 // pred_fallthru
      _
    // Predicated region
    $region14: #{tpu_custom_call.1} parent=1 // pred_check
      _
    $region15: #{tpu_custom_call.1} parent=1 // pred_check_branch
      %25 = sbr.rel (0) target = $region17
    $region16: #{tpu_custom_call.1} parent=1 // pred_region
      %26 = dma.done [#allocation4], 128
    $region17: #{tpu_custom_call.1} parent=1 // pred_fallthru
      _
    %v27 = vld [vmem:[#allocation3] sm:$0xff]
    %v28 = vld [vmem:[%s1] sm:$0x1]
    %s29 = sld [smem:[#allocation2]]
    %v31 = vlaneseq
    %v32 = vshrl.u32 %v31, 7
    %v33 = vsub.s32 0, %v32
    %v34 = vrot.slane %v28, %v33
    %v36 = vmul.f32 %v27, %v34
    %vm37 = vcmask 261120
    %v38 = vsel %vm37, %v36, 0.0
    %39 = vadd.xlane.f32.xlu0 %v38
    %v40 = vpop.xlane.xlu0 %39
    %v41 = vstv %s29
    %v42 = vadd.f32 %v40, %v41
    %v43 = vxor.u32 %v42, 2147483648
    %v44 = vmul.f32 %v43, 1.442695
    %v45 = vpow.pop %v44
    %v46 = vadd.f32 %v45, 1.0
    %v47 = vrcp.pop %v46
    %v48 = vmul.f32 1.0, %v47
    %vm49 = vcmask 7168
    %50 = vst.msk [vmem:[%s3] sm:$0xff] %vm49, %v48
    // Predicated region
    $region18: #{tpu_custom_call.1} parent=1 // pred_check
      _
    $region19: #{tpu_custom_call.1} parent=1 // pred_check_branch
      %52 = sbr.rel (0) target = $region21
    $region20: #{tpu_custom_call.1} parent=1 // pred_region
      _
    $region21: #{tpu_custom_call.1} parent=1 // pred_fallthru
      _
    // Predicated region
    $region22: #{tpu_custom_call.1} parent=1 // pred_check
      _
    $region23: #{tpu_custom_call.1} parent=1 // pred_check_branch
      %54 = sbr.rel (0) target = $region25
    $region24: #{tpu_custom_call.1} parent=1 // pred_region
      _
    $region25: #{tpu_custom_call.1} parent=1 // pred_fallthru
      _
    %55 = vsyncpa [#allocation4], 1

</llo_original>
